<compile_context>
chip_gen: v6e
topology: v6e:2x2x1
jax: 0.10.0
libtpu: 0.0.40
codegen_flags: <defaults>
</compile_context>

<pallas_src>
import functools

import jax
import jax.numpy as jnp
from jax.experimental import pallas as pl
from jax.experimental.pallas import tpu as pltpu

# Pendulum-v1 dimensions (from the reference module's env setup).
STATE_DIM = 3       # env.observation_space.shape[0]
ACTION_DIM = 1      # env.action_space.shape[0]
HIDDEN_DIM = 64
ACTION_BOUND = 2.0  # env.action_space.high[0]


def _cdiv(a, b):
    return -(-a // b)


def _round_up(n, m):
    return ((n + m - 1) // m) * m


def _policy_kernel(x_ref, w1_ref, b1_ref, w2_ref, b2_ref, o_ref, *, action_bound):
    # x_ref:  [state_dim, TILE_B]  feature-major tile (batch on lanes), f32
    # w1_ref: [hidden, state_dim]  torch [out, in] layout, VMEM-resident
    # b1_ref: [hidden, 1]          f32, VMEM-resident
    # w2_ref: [action, hidden]     VMEM-resident
    # b2_ref: [action]             f32 scalar in SMEM
    # o_ref:  [action, TILE_B]     f32, lane-dense stores
    h = jnp.dot(w1_ref[...], x_ref[...], preferred_element_type=jnp.float32)  # MXU
    h = jnp.maximum(h + b1_ref[...], 0.0)          # bias + ReLU on the VPU (f32)
    a = jnp.dot(w2_ref[...], h, preferred_element_type=jnp.float32)           # MXU
    a = a + b2_ref[0]                              # scalar bias from SMEM
    o_ref[...] = (jnp.tanh(a) * action_bound).astype(o_ref.dtype)


def _choose_tiling(B, tile_b_cap):
    """Pick (tile_b, padded_B): pad only to 128, >=2 tiles when possible (v7x)."""
    b128 = _round_up(B, 128)
    n_tiles = _cdiv(b128, min(tile_b_cap, b128))
    if b128 // 128 >= 2:
        n_tiles = max(n_tiles, 2)        # feed both TensorCores on v7x
    tile_b = _round_up(_cdiv(b128, n_tiles), 128)
    b_padded = _round_up(b128, tile_b)   # waste is < tile_b, i.e. ~B / n_tiles
    return tile_b, b_padded


def policy_net_forward_fm(x_fm, w1, b1, w2, b2, *, action_bound=ACTION_BOUND,
                          tile_b_cap=32768):
    """Feature-major fast path (zero wrapper copies when B % 128 == 0).

    x_fm: [state_dim, B]; w1: [hidden, state_dim]; b1: [hidden];
    w2: [action_dim, hidden]; b2: [action_dim]  ->  [action_dim, B] float32.
    """
    S, B = x_fm.shape
    H = w1.shape[0]
    A = w2.shape[0]

    b1_col = b1.reshape(H, 1).astype(jnp.float32)
    b2_s = b2.reshape(A).astype(jnp.float32)

    tile_b, b_padded = _choose_tiling(B, tile_b_cap)
    if b_padded != B:
        x_fm = jnp.pad(x_fm, ((0, 0), (0, b_padded - B)))

    grid = (b_padded // tile_b,)
    kernel = functools.partial(_policy_kernel, action_bound=float(action_bound))

    out_fm = pl.pallas_call(
        kernel,
        out_shape=jax.ShapeDtypeStruct((A, b_padded), jnp.float32),
        grid=grid,
        in_specs=[
            pl.BlockSpec((S, tile_b), lambda i: (0, i)),         # x: batch-tiled
            pl.BlockSpec((H, S), lambda i: (0, 0)),              # w1: VMEM-resident
            pl.BlockSpec((H, 1), lambda i: (0, 0)),              # b1: VMEM-resident
            pl.BlockSpec((A, H), lambda i: (0, 0)),              # w2: VMEM-resident
            pl.BlockSpec(memory_space=pltpu.MemorySpace.SMEM),   # b2: scalar in SMEM
        ],
        out_specs=pl.BlockSpec((A, tile_b), lambda i: (0, i)),
        compiler_params=pltpu.CompilerParams(
            dimension_semantics=("parallel",),   # shard batch tiles across TCs (v7x)
            vmem_limit_bytes=32 * 1024 * 1024,   # ample for <=32K-column tiles
        ),
    )(x_fm.astype(jnp.float32), w1.astype(jnp.float32), b1_col,
      w2.astype(jnp.float32), b2_s)

    if b_padded != B:
        out_fm = out_fm[:, :B]
    return out_fm


def _forward_jnp(x, w1, b1, w2, b2, action_bound=ACTION_BOUND):
    h = jnp.maximum(x @ w1.T + b1, 0.0)
    return jnp.tanh(h @ w2.T + b2) * action_bound


def policy_net_forward(x, w1, b1, w2, b2, *, action_bound=ACTION_BOUND,
                       small_batch_threshold=1024, tile_b_cap=32768):
    """Torch-like API matching PolicyNet.forward.

    x: [B, state_dim]; weights in torch nn.Linear layout. Returns [B, action_dim].
    For B < small_batch_threshold the plain-XLA path is lower latency than a
    pallas_call launch plus transpose/pad HLOs; large batches go through the
    feature-major Pallas kernel (callers that already store data feature-major
    should use policy_net_forward_fm directly and skip the transposes).
    """
    B = x.shape[0]
    if B < small_batch_threshold:
        return _forward_jnp(x, w1, b1, w2, b2, action_bound)
    out_fm = policy_net_forward_fm(x.T, w1, b1, w2, b2,
                                   action_bound=action_bound,
                                   tile_b_cap=tile_b_cap)
    return out_fm.T   # [1, B] -> [B, 1]: layout-only, effectively free


def init_params(key, state_dim=STATE_DIM, hidden_dim=HIDDEN_DIM,
                action_dim=ACTION_DIM):
    """torch.nn.Linear-style init, weights stored as [out_features, in_features]."""
    k1, k2, k3, k4 = jax.random.split(key, 4)
    lim1 = 1.0 / jnp.sqrt(jnp.float32(state_dim))
    lim2 = 1.0 / jnp.sqrt(jnp.float32(hidden_dim))
    w1 = jax.random.uniform(k1, (hidden_dim, state_dim), jnp.float32, -lim1, lim1)
    b1 = jax.random.uniform(k2, (hidden_dim,), jnp.float32, -lim1, lim1)
    w2 = jax.random.uniform(k3, (action_dim, hidden_dim), jnp.float32, -lim2, lim2)
    b2 = jax.random.uniform(k4, (action_dim,), jnp.float32, -lim2, lim2)
    return w1, b1, w2, b2


if __name__ == "__main__":
    key = jax.random.PRNGKey(0)
    kp, kx1, kx2, kx3 = jax.random.split(key, 4)
    w1, b1, w2, b2 = init_params(kp)

    # 1) Tiny batch (action selection): small-batch jnp fast path.
    x_small = jax.random.normal(kx1, (2, STATE_DIM), jnp.float32)
    out_small = jax.block_until_ready(policy_net_forward(x_small, w1, b1, w2, b2))
    ref_small = _forward_jnp(x_small, w1, b1, w2, b2)
    assert out_small.shape == (2, ACTION_DIM)
    assert jnp.allclose(out_small, ref_small, atol=1e-5, rtol=1e-5)

    # 2) Ragged batch forced through the Pallas path: exercises 128-pad + 2-tile grid.
    x_mid = jax.random.normal(kx2, (300, STATE_DIM), jnp.float32)
    out_mid = jax.block_until_ready(
        policy_net_forward(x_mid, w1, b1, w2, b2, small_batch_threshold=0))
    ref_mid = _forward_jnp(x_mid, w1, b1, w2, b2)
    assert out_mid.shape == (300, ACTION_DIM)
    assert jnp.allclose(out_mid, ref_mid, atol=1e-4, rtol=1e-4)

    # 3) Feature-major fast path, batch a multiple of 128 (zero wrapper copies).
    x_fm = jax.random.normal(kx3, (STATE_DIM, 4096), jnp.float32)
    out_fm = jax.block_until_ready(policy_net_forward_fm(x_fm, w1, b1, w2, b2))
    ref_fm = _forward_jnp(x_fm.T, w1, b1, w2, b2).T
    assert out_fm.shape == (ACTION_DIM, 4096)
    assert jnp.allclose(out_fm, ref_fm, atol=1e-4, rtol=1e-4)

    print("KERNEL_OK")
</pallas_src>

<mosaic_0001>
module attributes {stable_mosaic.version = 11 : i64} {
  func.func @_policy_kernel(%arg0: i32, %arg1: memref<3x256xf32, #tpu.memory_space<vmem>>, %arg2: memref<64x3xf32, #tpu.memory_space<vmem>>, %arg3: memref<64x1xf32, #tpu.memory_space<vmem>>, %arg4: memref<1x64xf32, #tpu.memory_space<vmem>>, %arg5: memref<1xf32, #tpu.memory_space<smem>>, %arg6: memref<1x256xf32, #tpu.memory_space<vmem>>) attributes {dimension_semantics = [#tpu.dimension_semantics<parallel>], iteration_bounds = array<i64: 2>, scalar_prefetch = 0 : i64, scratch_operands = 0 : i64, tpu.core_type = #tpu.core_type<tc>, window_params = [{transform_indices = @transform_0, window_bounds = array<i64: 3, 256>}, {pipeline_mode = #tpu.pipeline_mode<synchronous>, transform_indices = @transform_1, window_bounds = array<i64: 64, 3>}, {pipeline_mode = #tpu.pipeline_mode<synchronous>, transform_indices = @transform_2, window_bounds = array<i64: 64, 1>}, {pipeline_mode = #tpu.pipeline_mode<synchronous>, transform_indices = @transform_3, window_bounds = array<i64: 1, 64>}, {transform_indices = @transform_4, window_bounds = array<i64: 1>}, {transform_indices = @transform_5, window_bounds = array<i64: 1, 256>}]} {
    %c0 = arith.constant 0 : index
    %c0_0 = arith.constant 0 : index
    %0 = vector.load %arg2[%c0, %c0_0] : memref<64x3xf32, #tpu.memory_space<vmem>>, vector<64x3xf32>
    %c0_1 = arith.constant 0 : index
    %c0_2 = arith.constant 0 : index
    %1 = vector.load %arg1[%c0_1, %c0_2] : memref<3x256xf32, #tpu.memory_space<vmem>>, vector<3x256xf32>
    %cst = arith.constant dense<0.000000e+00> : vector<64x256xf32>
    %2 = tpu.matmul %0, %1, %cst {dimension_numbers = #tpu.dot_dimension_numbers<[1], [0], [0], [1], [0, 0, 1, 1], [], []>} : vector<64x3xf32>, vector<3x256xf32>, vector<64x256xf32> -> vector<64x256xf32>
    %c0_3 = arith.constant 0 : index
    %c0_4 = arith.constant 0 : index
    %3 = vector.load %arg3[%c0_3, %c0_4] : memref<64x1xf32, #tpu.memory_space<vmem>>, vector<64x1xf32>
    %4 = vector.broadcast %3 : vector<64x1xf32> to vector<64x256xf32>
    %5 = arith.addf %2, %4 : vector<64x256xf32>
    %cst_5 = arith.constant 0.000000e+00 : f32
    %6 = vector.broadcast %cst_5 : f32 to vector<64x256xf32>
    %7 = arith.maximumf %5, %6 : vector<64x256xf32>
    %c0_6 = arith.constant 0 : index
    %c0_7 = arith.constant 0 : index
    %8 = vector.load %arg4[%c0_6, %c0_7] : memref<1x64xf32, #tpu.memory_space<vmem>>, vector<1x64xf32>
    %cst_8 = arith.constant dense<0.000000e+00> : vector<1x256xf32>
    %9 = tpu.matmul %8, %7, %cst_8 {dimension_numbers = #tpu.dot_dimension_numbers<[1], [0], [0], [1], [0, 0, 1, 1], [], []>} : vector<1x64xf32>, vector<64x256xf32>, vector<1x256xf32> -> vector<1x256xf32>
    %c0_9 = arith.constant 0 : index
    %10 = memref.load %arg5[%c0_9] : memref<1xf32, #tpu.memory_space<smem>>
    %11 = vector.broadcast %10 : f32 to vector<1x256xf32>
    %12 = arith.addf %9, %11 : vector<1x256xf32>
    %13 = math.tanh %12 : vector<1x256xf32>
    %cst_10 = arith.constant 2.000000e+00 : f32
    %14 = vector.broadcast %cst_10 : f32 to vector<1x256xf32>
    %15 = arith.mulf %13, %14 : vector<1x256xf32>
    %c0_11 = arith.constant 0 : index
    %c0_12 = arith.constant 0 : index
    %16 = vector.load %arg6[%c0_11, %c0_12] : memref<1x256xf32, #tpu.memory_space<vmem>>, vector<1x256xf32>
    tpu.vector_store %arg6[%c0_11, %c0_12], %15 {strides = array<i32>} : memref<1x256xf32, #tpu.memory_space<vmem>>, vector<1x256xf32>,
    return
  }
  func.func @transform_0(%arg0: i32) -> (i32, i32) {
    %c0_i32 = arith.constant 0 : i32
    %c0_i32_0 = arith.constant 0 : i32
    return %c0_i32, %arg0 : i32, i32
  }
  func.func @transform_1(%arg0: i32) -> (i32, i32) {
    %c0_i32 = arith.constant 0 : i32
    %c0_i32_0 = arith.constant 0 : i32
    %c0_i32_1 = arith.constant 0 : i32
    return %c0_i32, %c0_i32_0 : i32, i32
  }
  func.func @transform_2(%arg0: i32) -> (i32, i32) {
    %c0_i32 = arith.constant 0 : i32
    %c0_i32_0 = arith.constant 0 : i32
    %c0_i32_1 = arith.constant 0 : i32
    return %c0_i32, %c0_i32_0 : i32, i32
  }
  func.func @transform_3(%arg0: i32) -> (i32, i32) {
    %c0_i32 = arith.constant 0 : i32
    %c0_i32_0 = arith.constant 0 : i32
    %c0_i32_1 = arith.constant 0 : i32
    return %c0_i32, %c0_i32_0 : i32, i32
  }
  func.func @transform_4(%arg0: i32) -> i32 {
    %c0_i32 = arith.constant 0 : i32
    %c0_i32_0 = arith.constant 0 : i32
    return %c0_i32 : i32
  }
  func.func @transform_5(%arg0: i32) -> (i32, i32) {
    %c0_i32 = arith.constant 0 : i32
    %c0_i32_0 = arith.constant 0 : i32
    return %c0_i32, %arg0 : i32, i32
  }
}

</mosaic_0001>

<llo_original>
// kernel: tpu_custom_call.1
$region0: #{tpu_custom_call.1}
  #allocation0 [shape = 'u32[]', space=smem, size = 0x4, offset = 0x4, fixed_abs, tag = 'smem constant byte address 0x4 - core index']
  #allocation1 [shape = 'u32[144,128]{1,0:T(1,128)}', space=vmem, size = 0x12000, scoped, tag = 'internal scratch']
  #allocation2 [shape = 'f32[1]{0:T(128)S(6)}', space=smem, size = 0x200, scoped, tag = 'scoped memory for tpu_custom_call.1']
  %s0 = inlined_call_operand.vmem [shape: f32[3,512], index: 0, kind: input, shape index: {}]
  %s1 = inlined_call_operand.vmem [shape: f32[64,3], index: 1, kind: input, shape index: {}]
  %s2 = inlined_call_operand.vmem [shape: f32[64,1], index: 2, kind: input, shape index: {}]
  %s3 = inlined_call_operand.vmem [shape: f32[1,64], index: 3, kind: input, shape index: {}]
  %s4 = inlined_call_operand.<no memory space> [shape: f32[1], index: 4, kind: input, shape index: {}]
  %s5 = inlined_call_operand.hbm [shape: f32[1,512], index: 5, kind: output, shape index: {}]
  %s6 = sld [smem:[#allocation0]]
  $region53: #{tpu_custom_call.1} parent=0
    _
  %s8 = ssub.s32 1, %s6
  %s9 = scalar_select 0, %s8, %s6
  %10 = sst [smem:[#allocation2]] %s4
  $region1: #{tpu_custom_call.1} parent=0
    #allocation3 [shape = 'u8[2048]{0}', space=vmem, size = 0x800, scoped, tag = 'output window, operand 0']
    #allocation4 [shape = 's32[2]{0}', space=sflag, size = 0x8, scoped, tag = 'scoped memory for tpu_custom_call.1']
    %11 = vsyncpa [#allocation4], 0
    %s12 = scalar_lea.sflag [#allocation4], 1
    %13 = vsyncpa %s12, 0
    loop: start=0, step=1, limit=4
    $region2: #{tpu_custom_call.1} parent=1 // loop_pre_header
      _
    $region3: #{tpu_custom_call.1} parent=1 // loop_header
      %s15 = sphi 0, %s19
      %p16 = scmp.ge.s32.totalorder %s15, 4
      %s25 = sphi 0, %s27
      %s28 = sphi 0, %s25
      %s29 = sphi 0, %s28
      %s45 = sphi 0, %s29
      %s49 = sphi 0, %s49
      %s51 = sphi 0, %s49
      %s52 = sphi 0, %s51
      %s66 = sphi 0, %s52
      %s70 = sphi 0, %s70
      %s72 = sphi 0, %s70
      %s73 = sphi 0, %s72
      %s87 = sphi 0, %s73
      %s91 = sphi 0, %s91
      %s93 = sphi 0, %s91
      %s94 = sphi 0, %s93
      %s108 = sphi 0, %s94
      %s112 = sphi 0, %s112
      %s114 = sphi 0, %s112
      %s115 = sphi 0, %s114
      %s129 = sphi 0, %s115
      %s135 = sphi 0, %s137
      %s138 = sphi 0, %s135
      %s139 = sphi 0, %s138
      %s155 = sphi 0, %s139
    $region4: #{tpu_custom_call.1} parent=1 // loop_header_branch
      %18 = sbr.rel (%p16) target = $region8
    $region5: #{tpu_custom_call.1} parent=1 // loop_body
      %s20 = ssub.s32 %s15, 1
      %s21 = ssub.s32 %s15, 2
      %s22 = sadd.s32 %s15, 1
      %s23 = ssub.s32 %s15, %s22
      %p24 = scmp.eq.s32.totalorder %s23, 0
      %s26 = sadd.s32 %s25, 1
      %s27 = scalar_select %p24, %s25, %s26
      %p30 = pneg %p24
      %p31 = scmp.eq.s32.totalorder %s15, 1
      %p32 = por %p30, %p31
      %p33 = scmp.ne.s32.totalorder %s25, %s28
      %p34 = scmp.eq.s32.totalorder %s15, 0
      %p35 = por %p33, %p34
      %p36 = scmp.ne.s32.totalorder %s25, %s28
      %p37 = scmp.eq.s32.totalorder %s20, 1
      %p38 = por %p36, %p37
      %p39 = scmp.ne.s32.totalorder %s28, %s29
      %p40 = scmp.eq.s32.totalorder %s20, 0
      %p41 = por %p39, %p40
      %p42 = scmp.ne.s32.totalorder %s28, %s29
      %p43 = scmp.eq.s32.totalorder %s21, 1
      %p44 = por %p42, %p43
      %p46 = scmp.ne.s32.totalorder %s29, %s45
      %p47 = scmp.eq.s32.totalorder %s21, 0
      %p48 = por %p46, %p47
      %s50 = sadd.s32 %s49, 1
      %p53 = scmp.eq.s32.totalorder %s15, 1
      %p54 = scmp.ne.s32.totalorder %s49, %s51
      %p55 = scmp.eq.s32.totalorder %s15, 0
      %p56 = por %p54, %p55
      %p57 = scmp.ne.s32.totalorder %s49, %s51
      %p58 = scmp.eq.s32.totalorder %s20, 1
      %p59 = por %p57, %p58
      %p60 = scmp.ne.s32.totalorder %s51, %s52
      %p61 = scmp.eq.s32.totalorder %s20, 0
      %p62 = por %p60, %p61
      %p63 = scmp.ne.s32.totalorder %s51, %s52
      %p64 = scmp.eq.s32.totalorder %s21, 1
      %p65 = por %p63, %p64
      %p67 = scmp.ne.s32.totalorder %s52, %s66
      %p68 = scmp.eq.s32.totalorder %s21, 0
      %p69 = por %p67, %p68
      %s71 = sadd.s32 %s70, 1
      %p74 = scmp.eq.s32.totalorder %s15, 1
      %p75 = scmp.ne.s32.totalorder %s70, %s72
      %p76 = scmp.eq.s32.totalorder %s15, 0
      %p77 = por %p75, %p76
      %p78 = scmp.ne.s32.totalorder %s70, %s72
      %p79 = scmp.eq.s32.totalorder %s20, 1
      %p80 = por %p78, %p79
      %p81 = scmp.ne.s32.totalorder %s72, %s73
      %p82 = scmp.eq.s32.totalorder %s20, 0
      %p83 = por %p81, %p82
      %p84 = scmp.ne.s32.totalorder %s72, %s73
      %p85 = scmp.eq.s32.totalorder %s21, 1
      %p86 = por %p84, %p85
      %p88 = scmp.ne.s32.totalorder %s73, %s87
      %p89 = scmp.eq.s32.totalorder %s21, 0
      %p90 = por %p88, %p89
      %s92 = sadd.s32 %s91, 1
      %p95 = scmp.eq.s32.totalorder %s15, 1
      %p96 = scmp.ne.s32.totalorder %s91, %s93
      %p97 = scmp.eq.s32.totalorder %s15, 0
      %p98 = por %p96, %p97
      %p99 = scmp.ne.s32.totalorder %s91, %s93
      %p100 = scmp.eq.s32.totalorder %s20, 1
      %p101 = por %p99, %p100
      %p102 = scmp.ne.s32.totalorder %s93, %s94
      %p103 = scmp.eq.s32.totalorder %s20, 0
      %p104 = por %p102, %p103
      %p105 = scmp.ne.s32.totalorder %s93, %s94
      %p106 = scmp.eq.s32.totalorder %s21, 1
      %p107 = por %p105, %p106
      %p109 = scmp.ne.s32.totalorder %s94, %s108
      %p110 = scmp.eq.s32.totalorder %s21, 0
      %p111 = por %p109, %p110
      %s113 = sadd.s32 %s112, 1
      %p116 = scmp.eq.s32.totalorder %s15, 1
      %p117 = scmp.ne.s32.totalorder %s112, %s114
      %p118 = scmp.eq.s32.totalorder %s15, 0
      %p119 = por %p117, %p118
      %p120 = scmp.ne.s32.totalorder %s112, %s114
      %p121 = scmp.eq.s32.totalorder %s20, 1
      %p122 = por %p120, %p121
      %p123 = scmp.ne.s32.totalorder %s114, %s115
      %p124 = scmp.eq.s32.totalorder %s20, 0
      %p125 = por %p123, %p124
      %p126 = scmp.ne.s32.totalorder %s114, %s115
      %p127 = scmp.eq.s32.totalorder %s21, 1
      %p128 = por %p126, %p127
      %p130 = scmp.ne.s32.totalorder %s115, %s129
      %p131 = scmp.eq.s32.totalorder %s21, 0
      %p132 = por %p130, %p131
      %s133 = ssub.s32 %s15, %s22
      %p134 = scmp.eq.s32.totalorder %s133, 0
      %s136 = sadd.s32 %s135, 1
      %s137 = scalar_select %p134, %s135, %s136
      %p140 = pneg %p134
      %p141 = scmp.eq.s32.totalorder %s15, 1
      %p142 = por %p140, %p141
      %p143 = scmp.ne.s32.totalorder %s135, %s138
      %p144 = scmp.eq.s32.totalorder %s15, 0
      %p145 = por %p143, %p144
      %p146 = scmp.ne.s32.totalorder %s135, %s138
      %p147 = scmp.eq.s32.totalorder %s20, 1
      %p148 = por %p146, %p147
      %p149 = scmp.ne.s32.totalorder %s138, %s139
      %p150 = scmp.eq.s32.totalorder %s20, 0
      %p151 = por %p149, %p150
      %p152 = scmp.ne.s32.totalorder %s138, %s139
      %p153 = scmp.eq.s32.totalorder %s21, 1
      %p154 = por %p152, %p153
      %p156 = scmp.ne.s32.totalorder %s139, %s155
      %p157 = scmp.eq.s32.totalorder %s21, 0
      %p158 = por %p156, %p157
      %p159 = scmp.le.s32.totalorder 1, %s15
      %p160 = scmp.lt.s32.totalorder %s15, 3
      %p161 = pnand %p159, %p160
      %p162 = pneg %p161
      // Predicated region
      $region9: #{tpu_custom_call.1} parent=5 // pred_check
        _
      $region10: #{tpu_custom_call.1} parent=5 // pred_check_branch
        %164 = sbr.rel (%p161) target = $region12
      $region11: #{tpu_custom_call.1} parent=5 // pred_region
        %s165 = ssub.s32 %s15, 1
        // Predicated region
        $region13: #{tpu_custom_call.1} parent=11 // pred_check
          %p166 = pneg %p62
        $region14: #{tpu_custom_call.1} parent=11 // pred_check_branch
          %168 = sbr.rel (%p166) target = $region16
        $region15: #{tpu_custom_call.1} parent=11 // pred_region
          _
        $region16: #{tpu_custom_call.1} parent=11 // pred_fallthru
          _
        // Predicated region
        $region17: #{tpu_custom_call.1} parent=11 // pred_check
          %p169 = pneg %p83
        $region18: #{tpu_custom_call.1} parent=11 // pred_check_branch
          %171 = sbr.rel (%p169) target = $region20
        $region19: #{tpu_custom_call.1} parent=11 // pred_region
          _
        $region20: #{tpu_custom_call.1} parent=11 // pred_fallthru
          _
        // Predicated region
        $region21: #{tpu_custom_call.1} parent=11 // pred_check
          %p172 = pneg %p104
        $region22: #{tpu_custom_call.1} parent=11 // pred_check_branch
          %174 = sbr.rel (%p172) target = $region24
        $region23: #{tpu_custom_call.1} parent=11 // pred_region
          _
        $region24: #{tpu_custom_call.1} parent=11 // pred_fallthru
          _
        // Predicated region
        $region25: #{tpu_custom_call.1} parent=11 // pred_check
          %p175 = pneg %p125
        $region26: #{tpu_custom_call.1} parent=11 // pred_check_branch
          %177 = sbr.rel (%p175) target = $region28
        $region27: #{tpu_custom_call.1} parent=11 // pred_region
          _
        $region28: #{tpu_custom_call.1} parent=11 // pred_fallthru
          _
      $region12: #{tpu_custom_call.1} parent=5 // pred_fallthru
        _
      %p178 = scmp.lt.s32.totalorder %s15, 2
      // Predicated region
      $region29: #{tpu_custom_call.1} parent=5 // pred_check
        %p179 = pneg %p178
      $region30: #{tpu_custom_call.1} parent=5 // pred_check_branch
        %181 = sbr.rel (%p179) target = $region32
      $region31: #{tpu_custom_call.1} parent=5 // pred_region
        // Predicated region
        $region33: #{tpu_custom_call.1} parent=31 // pred_check
          %p182 = pneg %p35
        $region34: #{tpu_custom_call.1} parent=31 // pred_check_branch
          %184 = sbr.rel (%p182) target = $region36
        $region35: #{tpu_custom_call.1} parent=31 // pred_region
          %s185 = smul.u32 2, %s15
          %p186 = scmp.lt.s32.totalorder %s185, 3
          %s187 = scalar_select %p186, %s185, 3
          %s188 = smul.addr %s187, 4
          %s189 = scalar_lea.vmem %s0, %s188
          %s190 = smul.u32 2, %s15
        $region36: #{tpu_custom_call.1} parent=31 // pred_fallthru
          _
      $region32: #{tpu_custom_call.1} parent=5 // pred_fallthru
        _
      %p191 = scmp.le.s32.totalorder 1, %s15
      %p192 = scmp.lt.s32.totalorder %s15, 3
      %p193 = pnand %p191, %p192
      %p194 = pneg %p193
      // Predicated region
      $region37: #{tpu_custom_call.1} parent=5 // pred_check
        _
      $region38: #{tpu_custom_call.1} parent=5 // pred_check_branch
        %196 = sbr.rel (%p193) target = $region40
      $region39: #{tpu_custom_call.1} parent=5 // pred_region
        %s197 = ssub.s32 %s15, 1
        %s198 = smul.u32 2, %s20
        %p199 = scmp.lt.s32.totalorder %s198, 3
        %s200 = scalar_select %p199, %s198, 3
        %s201 = smul.addr %s200, 4
        %s202 = scalar_lea.vmem %s0, %s201
        %p203 = pneg %p41
        %p204 = pneg %p38
        %p205 = pneg %p62
        %p206 = pneg %p59
        %p207 = pneg %p83
        %p208 = pneg %p80
        %p209 = pneg %p104
        %p210 = pneg %p101
        %p211 = pneg %p125
        %p212 = pneg %p122
        %p213 = pneg %p151
        %p214 = pneg %p148
        %s215 = sand.u32 %s138, 1
        %s216 = scalar_lea.sflag [#allocation4], %s215
        %s217 = sand.u32 %s138, 1
        %s218 = smul.addr %s217, 2
        %s219 = scalar_lea.vmem [#allocation3], %s218
        %s220 = smul.u32 2, %s20
        %p221 = scmp.lt.s32.totalorder %s220, 3
        %s222 = scalar_select %p221, %s220, 3
        %s223 = smul.addr %s222, 4
        %s224 = scalar_lea.vmem %s0, %s223
        %s225 = smul.u32 2, %s20
        %s226 = smul.u32 2, %s20
        %v227 = vld [vmem:[%s1] sm:$0xff]
        %v228 = vld [vmem:[%s1 + $0x8] sm:$0xff]
        %v229 = vld [vmem:[%s1 + $0x10] sm:$0xff]
        %v230 = vld [vmem:[%s1 + $0x18] sm:$0xff]
        %v231 = vld [vmem:[%s1 + $0x20] sm:$0xff]
        %v232 = vld [vmem:[%s1 + $0x28] sm:$0xff]
        %v233 = vld [vmem:[%s1 + $0x30] sm:$0xff]
        %v234 = vld [vmem:[%s1 + $0x38] sm:$0xff]
        %v235 = vld [vmem:[%s224] sm:$0x77]
        %v236 = vld [vmem:[%s2] sm:$0xff]
        %v237 = vld [vmem:[%s2 + $0x8] sm:$0xff]
        %v238 = vld [vmem:[%s2 + $0x10] sm:$0xff]
        %v239 = vld [vmem:[%s2 + $0x18] sm:$0xff]
        %v240 = vld [vmem:[%s2 + $0x20] sm:$0xff]
        %v241 = vld [vmem:[%s2 + $0x28] sm:$0xff]
        %v242 = vld [vmem:[%s2 + $0x30] sm:$0xff]
        %v243 = vld [vmem:[%s2 + $0x38] sm:$0xff]
        %245 = vset.pattern.permute.xlu0 0
        %246 = vperm.xlu0 %245, %v236
        %v247 = vpop.permute.xlu0 %246
        %250 = vset.pattern.permute.xlu0 0
        %251 = vperm.xlu0 %250, %v237
        %v252 = vpop.permute.xlu0 %251
        %255 = vset.pattern.permute.xlu0 0
        %256 = vperm.xlu0 %255, %v238
        %v257 = vpop.permute.xlu0 %256
        %260 = vset.pattern.permute.xlu0 0
        %261 = vperm.xlu0 %260, %v239
        %v262 = vpop.permute.xlu0 %261
        %265 = vset.pattern.permute.xlu0 0
        %266 = vperm.xlu0 %265, %v240
        %v267 = vpop.permute.xlu0 %266
        %270 = vset.pattern.permute.xlu0 0
        %271 = vperm.xlu0 %270, %v241
        %v272 = vpop.permute.xlu0 %271
        %275 = vset.pattern.permute.xlu0 0
        %276 = vperm.xlu0 %275, %v242
        %v277 = vpop.permute.xlu0 %276
        %280 = vset.pattern.permute.xlu0 0
        %281 = vperm.xlu0 %280, %v243
        %v282 = vpop.permute.xlu0 %281
        %v285 = vcombine.high %v235, %v235
        %vm286 = vcmask 23552
        %v288 = vsel %vm286, %v227, 0
        %v291 = vsel %vm286, %v228, 0
        %v294 = vsel %vm286, %v229, 0
        %v297 = vsel %vm286, %v230, 0
        %v300 = vsel %vm286, %v231, 0
        %v303 = vsel %vm286, %v232, 0
        %v306 = vsel %vm286, %v233, 0
        %v309 = vsel %vm286, %v234, 0
        %vm311 = vcmask 1042432
        %v312 = vsel %vm311, %v235, 0
        %v314 = vsel %vm311, %v285, 0
        %316 = vmatprep.subr.mxu0 0.0
        %317 = vmatpush1.msra.mxu0 0.0
        %318 = vmatprep.subr.mxu0 0.0
        %319 = vmatpush1.msra.mxu0 0.0
        %320 = vmatprep.subr.mxu0 0.0
        %321 = vmatpush1.msra.mxu0 0.0
        %322 = vmatprep.subr.mxu0 0.0
        %323 = vmatpush1.msra.mxu0 0.0
        %324 = vmatprep.subr.mxu0 0.0
        %325 = vmatpush1.msra.mxu0 0.0
        %326 = vmatprep.subr.mxu0 0.0
        %327 = vmatpush1.msra.mxu0 0.0
        %328 = vmatprep.subr.mxu0 0.0
        %329 = vmatpush1.msra.mxu0 0.0
        %330 = vmatprep.subr.mxu0 0.0
        %331 = vmatpush1.msra.mxu0 0.0
        %332 = vmatprep.subr.mxu0 0.0
        %333 = vmatpush1.msra.mxu0 0.0
        %334 = vmatprep.subr.mxu0 0.0
        %335 = vmatpush1.msra.mxu0 0.0
        %336 = vmatprep.subr.mxu0 0.0
        %337 = vmatpush1.msra.mxu0 0.0
        %338 = vmatprep.subr.mxu0 0.0
        %339 = vmatpush1.msra.mxu0 0.0
        %340 = vmatprep.subr.mxu0 0.0
        %341 = vmatpush1.msra.mxu0 0.0
        %342 = vmatprep.subr.mxu0 0.0
        %343 = vmatpush1.msra.mxu0 0.0
        %344 = vmatprep.subr.mxu0 0.0
        %345 = vmatpush1.msra.mxu0 0.0
        %346 = vmatprep.subr.mxu0 %v314
        %347 = vmatpush1.msra.mxu0 %v312
        %348 = vmatprep.subr.mxu0 0.0
        %349 = vmatpush2.msra.mxu0 0.0
        %350 = vmatprep.subr.mxu0 0.0
        %351 = vmatpush2.msra.mxu0 0.0
        %352 = vmatprep.subr.mxu0 0.0
        %353 = vmatpush2.msra.mxu0 0.0
        %354 = vmatprep.subr.mxu0 0.0
        %355 = vmatpush2.msra.mxu0 0.0
        %356 = vmatprep.subr.mxu0 0.0
        %357 = vmatpush2.msra.mxu0 0.0
        %358 = vmatprep.subr.mxu0 0.0
        %359 = vmatpush2.msra.mxu0 0.0
        %360 = vmatprep.subr.mxu0 0.0
        %361 = vmatpush2.msra.mxu0 0.0
        %362 = vmatprep.subr.mxu0 0.0
        %363 = vmatpush2.msra.mxu0 0.0
        %364 = vmatprep.subr.mxu0 0.0
        %365 = vmatpush2.msra.mxu0 0.0
        %366 = vmatprep.subr.mxu0 0.0
        %367 = vmatpush2.msra.mxu0 0.0
        %368 = vmatprep.subr.mxu0 0.0
        %369 = vmatpush2.msra.mxu0 0.0
        %370 = vmatprep.subr.mxu0 0.0
        %371 = vmatpush2.msra.mxu0 0.0
        %372 = vmatprep.subr.mxu0 0.0
        %373 = vmatpush2.msra.mxu0 0.0
        %374 = vmatprep.subr.mxu0 0.0
        %375 = vmatpush2.msra.mxu0 0.0
        %376 = vmatprep.subr.mxu0 0.0
        %377 = vmatpush2.msra.mxu0 0.0
        %378 = vmatprep.subr.mxu0 0.0
        %379 = vmatpush2.msra.mxu0 0.0
        %380 = vmatprep.mubr.f32.mxu0 0.0
        %381 = vmatmul.mubr.f32.gmra.mxu0 %v288
        %v382 = vpop.f32.mrf.mxu0
        %v383 = vadd.f32 %v247, %v382
        %v384 = vpop.f32.mrf.mxu0
        %v385 = vadd.f32 %v247, %v384
        %386 = vmatprep.mubr.f32.mxu0 0.0
        %387 = vmatmul.mubr.f32.gmra.mxu0 %v291
        %v388 = vpop.f32.mrf.mxu0
        %v389 = vadd.f32 %v252, %v388
        %v390 = vpop.f32.mrf.mxu0
        %v391 = vadd.f32 %v252, %v390
        %392 = vmatprep.mubr.f32.mxu0 0.0
        %393 = vmatmul.mubr.f32.gmra.mxu0 %v294
        %v394 = vpop.f32.mrf.mxu0
        %v395 = vadd.f32 %v257, %v394
        %v396 = vpop.f32.mrf.mxu0
        %v397 = vadd.f32 %v257, %v396
        %398 = vmatprep.mubr.f32.mxu0 0.0
        %399 = vmatmul.mubr.f32.gmra.mxu0 %v297
        %v400 = vpop.f32.mrf.mxu0
        %v401 = vadd.f32 %v262, %v400
        %v402 = vpop.f32.mrf.mxu0
        %v403 = vadd.f32 %v262, %v402
        %404 = vmatprep.mubr.f32.mxu0 0.0
        %405 = vmatmul.mubr.f32.gmra.mxu0 %v300
        %v406 = vpop.f32.mrf.mxu0
        %v407 = vadd.f32 %v267, %v406
        %v408 = vpop.f32.mrf.mxu0
        %v409 = vadd.f32 %v267, %v408
        %410 = vmatprep.mubr.f32.mxu0 0.0
        %411 = vmatmul.mubr.f32.gmra.mxu0 %v303
        %v412 = vpop.f32.mrf.mxu0
        %v413 = vadd.f32 %v272, %v412
        %v414 = vpop.f32.mrf.mxu0
        %v415 = vadd.f32 %v272, %v414
        %416 = vmatprep.mubr.f32.mxu0 0.0
        %417 = vmatmul.mubr.f32.gmra.mxu0 %v306
        %v418 = vpop.f32.mrf.mxu0
        %v419 = vadd.f32 %v277, %v418
        %v420 = vpop.f32.mrf.mxu0
        %v421 = vadd.f32 %v277, %v420
        %422 = vmatprep.mubr.f32.mxu0 0.0
        %423 = vmatmul.mubr.f32.gmra.mxu0 %v309
        %v424 = vpop.f32.mrf.mxu0
        %v425 = vadd.f32 %v282, %v424
        %v426 = vpop.f32.mrf.mxu0
        %v427 = vadd.f32 %v282, %v426
        %428 = vdwg.mxu0
        %v429 = vmax.f32 %v383, 0.0
        %v430 = vmax.f32 %v385, 0.0
        %v431 = vmax.f32 %v389, 0.0
        %v432 = vmax.f32 %v391, 0.0
        %v433 = vmax.f32 %v395, 0.0
        %v434 = vmax.f32 %v397, 0.0
        %v435 = vmax.f32 %v401, 0.0
        %v436 = vmax.f32 %v403, 0.0
        %v437 = vmax.f32 %v407, 0.0
        %v438 = vmax.f32 %v409, 0.0
        %v439 = vmax.f32 %v413, 0.0
        %v440 = vmax.f32 %v415, 0.0
        %v441 = vmax.f32 %v419, 0.0
        %v442 = vmax.f32 %v421, 0.0
        %v443 = vmax.f32 %v425, 0.0
        %v444 = vmax.f32 %v427, 0.0
        %v445 = vld [vmem:[%s3] sm:$0x1]
        %s446 = sld [smem:[#allocation2]]
        %v447 = vstv %s446
        %vm448 = vcmask 523264
        %v450 = vsel %vm448, %v445, 0
        %452 = vmatprep.subr.mxu0 0.0
        %453 = vmatpush1.msra.mxu0 0.0
        %454 = vmatprep.subr.mxu0 0.0
        %455 = vmatpush1.msra.mxu0 0.0
        %456 = vmatprep.subr.mxu0 0.0
        %457 = vmatpush1.msra.mxu0 0.0
        %458 = vmatprep.subr.mxu0 0.0
        %459 = vmatpush1.msra.mxu0 0.0
        %460 = vmatprep.subr.mxu0 0.0
        %461 = vmatpush1.msra.mxu0 0.0
        %462 = vmatprep.subr.mxu0 0.0
        %463 = vmatpush1.msra.mxu0 0.0
        %464 = vmatprep.subr.mxu0 0.0
        %465 = vmatpush1.msra.mxu0 0.0
        %466 = vmatprep.subr.mxu0 0.0
        %467 = vmatpush1.msra.mxu0 0.0
        %468 = vmatprep.subr.mxu0 %v444
        %469 = vmatpush1.msra.mxu0 %v443
        %470 = vmatprep.subr.mxu0 %v442
        %471 = vmatpush1.msra.mxu0 %v441
        %472 = vmatprep.subr.mxu0 %v440
        %473 = vmatpush1.msra.mxu0 %v439
        %474 = vmatprep.subr.mxu0 %v438
        %475 = vmatpush1.msra.mxu0 %v437
        %476 = vmatprep.subr.mxu0 %v436
        %477 = vmatpush1.msra.mxu0 %v435
        %478 = vmatprep.subr.mxu0 %v434
        %479 = vmatpush1.msra.mxu0 %v433
        %480 = vmatprep.subr.mxu0 %v432
        %481 = vmatpush1.msra.mxu0 %v431
        %482 = vmatprep.subr.mxu0 %v430
        %483 = vmatpush1.msra.mxu0 %v429
        %484 = vmatprep.subr.mxu0 0.0
        %485 = vmatpush2.msra.mxu0 0.0
        %486 = vmatprep.subr.mxu0 0.0
        %487 = vmatpush2.msra.mxu0 0.0
        %488 = vmatprep.subr.mxu0 0.0
        %489 = vmatpush2.msra.mxu0 0.0
        %490 = vmatprep.subr.mxu0 0.0
        %491 = vmatpush2.msra.mxu0 0.0
        %492 = vmatprep.subr.mxu0 0.0
        %493 = vmatpush2.msra.mxu0 0.0
        %494 = vmatprep.subr.mxu0 0.0
        %495 = vmatpush2.msra.mxu0 0.0
        %496 = vmatprep.subr.mxu0 0.0
        %497 = vmatpush2.msra.mxu0 0.0
        %498 = vmatprep.subr.mxu0 0.0
        %499 = vmatpush2.msra.mxu0 0.0
        %500 = vmatprep.subr.mxu0 0.0
        %501 = vmatpush2.msra.mxu0 0.0
        %502 = vmatprep.subr.mxu0 0.0
        %503 = vmatpush2.msra.mxu0 0.0
        %504 = vmatprep.subr.mxu0 0.0
        %505 = vmatpush2.msra.mxu0 0.0
        %506 = vmatprep.subr.mxu0 0.0
        %507 = vmatpush2.msra.mxu0 0.0
        %508 = vmatprep.subr.mxu0 0.0
        %509 = vmatpush2.msra.mxu0 0.0
        %510 = vmatprep.subr.mxu0 0.0
        %511 = vmatpush2.msra.mxu0 0.0
        %512 = vmatprep.subr.mxu0 0.0
        %513 = vmatpush2.msra.mxu0 0.0
        %514 = vmatprep.subr.mxu0 0.0
        %515 = vmatpush2.msra.mxu0 0.0
        %516 = vmatprep.mubr.f32.mxu0 0.0
        %517 = vmatmul.mubr.f32.gmra.mxu0 %v450
        %v518 = vpop.f32.mrf.mxu0
        %v519 = vadd.f32 %v447, %v518
        %v520 = vpop.f32.mrf.mxu0
        %v521 = vadd.f32 %v447, %v520
        %522 = vdwg.mxu0
        %v523 = vtanh.pop %v519
        %v524 = vtanh.pop %v521
        %v525 = vmul.f32 %v523, 2.0
        %v526 = vmul.f32 %v524, 2.0
        %v529 = vcombine.low %v525, %v526
        %v531 = vunpack.c.l.s4 1966171168
        %v532 = vunpack.c.0.s8 %v531
        %v533 = vlaneseq
        %v534 = vshrl.u32 %v533, 7
        %v535 = vsub.s32 %v532, %v534
        %v536 = vrot.slane %v529, %v535
        %v538 = vunpack.c.l.s4 1966171168
        %v539 = vunpack.c.0.s8 %v538
        %v540 = vlaneseq
        %v541 = vshrl.u32 %v540, 7
        %v542 = vsub.s32 %v539, %v541
        %v543 = vrot.slane %v536, %v542
        %v545 = vlaneseq
        %vm546 = vcmp.ge.s32.totalorder %v545, 0
        %vm547 = vcmp.lt.s32.totalorder %v545, 256
        %vm548 = vmand %vm546, %vm547
        %549 = vst.msk [vmem:[%s219] sm:$0x3] %vm548, %v543
        %s550 = sand.u32 %s138, 1
        %s551 = scalar_lea.sflag [#allocation4], %s550
        %s552 = sand.u32 %s138, 1
        %s553 = smul.addr %s552, 2
        %s554 = scalar_lea.vmem [#allocation3], %s553
        // Predicated region
        $region41: #{tpu_custom_call.1} parent=39 // pred_check
          %p555 = pneg %p148
        $region42: #{tpu_custom_call.1} parent=39 // pred_check_branch
          %557 = sbr.rel (%p555) target = $region44
        $region43: #{tpu_custom_call.1} parent=39 // pred_region
          %s558 = smul.u32 2, %s20
          %s560 = ssub.s32 32, 32
          %561 = vsyncadd %s551, %s560
          %s562 = smul.addr %s558, 16
          %s563 = scalar_lea.hbm %s5, %s562
          %s565 = sshll.u32 %s554, 4
          %s566 = int_to_ptr.vmem [resolvable:$true] %s565
          %568 = dma.vmem_to_hbm [thread:$0]  %s566, 32, %s563, %s551
        $region44: #{tpu_custom_call.1} parent=39 // pred_fallthru
          _
      $region40: #{tpu_custom_call.1} parent=5 // pred_fallthru
        _
      %p569 = scmp.le.s32.totalorder 2, %s15
      // Predicated region
      $region45: #{tpu_custom_call.1} parent=5 // pred_check
        %p570 = pneg %p569
      $region46: #{tpu_custom_call.1} parent=5 // pred_check_branch
        %572 = sbr.rel (%p570) target = $region48
      $region47: #{tpu_custom_call.1} parent=5 // pred_region
        %s573 = ssub.s32 %s15, 2
        // Predicated region
        $region49: #{tpu_custom_call.1} parent=47 // pred_check
          %p574 = pneg %p154
        $region50: #{tpu_custom_call.1} parent=47 // pred_check_branch
          %576 = sbr.rel (%p574) target = $region52
        $region51: #{tpu_custom_call.1} parent=47 // pred_region
          %s577 = sand.u32 %s139, 1
          %s578 = scalar_lea.sflag [#allocation4], %s577
          %s579 = sand.u32 %s139, 1
          %s580 = smul.addr %s579, 2
          %s581 = scalar_lea.vmem [#allocation3], %s580
          %582 = dma.done %s578, 32
        $region52: #{tpu_custom_call.1} parent=47 // pred_fallthru
          _
      $region48: #{tpu_custom_call.1} parent=5 // pred_fallthru
        _
    $region6: #{tpu_custom_call.1} parent=1 // loop_footer
      %s19 = sadd.s32 1, %s15
    $region7: #{tpu_custom_call.1} parent=1 // loop_footer_branch
      %14 = sbr.rel target = $region3
    $region8: #{tpu_custom_call.1} parent=1 // loop_exit
      _
    %583 = vsyncpa [#allocation4], 1
    %s584 = scalar_lea.sflag [#allocation4], 1
    %585 = vsyncpa %s584, 1

</llo_original>
